<compile_context>
chip_gen: v7x
topology: tpu7x:2x2x1
jax: 0.10.0
libtpu: 0.0.40
codegen_flags: <defaults>
</compile_context>

<pallas_src>
import jax
import jax.numpy as jnp
from jax.experimental import pallas as pl
from jax.experimental.pallas import tpu as pltpu


def _round_up(x, m):
    return ((x + m - 1) // m) * m


def _relpos_bias_kernel(tab_ref, onehot_ref, out_ref):
    # tab_ref:    [heads, vocab_pad] f32  -- embedding weight^T with zero pad column(s)
    # onehot_ref: [vocab_pad, tile_n] f32 -- precomputed one-hot (pad/zero cols included)
    # out_ref:    [heads, tile_n]     f32 -- lane-dense output tile
    out_ref[...] = jnp.dot(tab_ref[...], onehot_ref[...],
                           preferred_element_type=jnp.float32)


def relpos_bias_pallas(table_pad, onehot, tile_n):
    heads, vocab_pad = table_pad.shape
    _, n_pad = onehot.shape
    grid = (n_pad // tile_n,)
    out = pl.pallas_call(
        _relpos_bias_kernel,
        grid=grid,
        in_specs=[
            pl.BlockSpec((heads, vocab_pad), lambda n: (0, 0)),
            pl.BlockSpec((vocab_pad, tile_n), lambda n: (0, n)),
        ],
        out_specs=pl.BlockSpec((heads, tile_n), lambda n: (0, n)),
        out_shape=jax.ShapeDtypeStruct((heads, n_pad), jnp.float32),
        compiler_params=pltpu.CompilerParams(
            dimension_semantics=("parallel",)),
    )(table_pad, onehot)
    return out  # [heads, n_pad]; caller slices/reshapes


class RelPosBias2d:
    def __init__(self, size, heads, key):
        self.size = size
        self.heads = heads
        self.vocab = (2 * size - 1) ** 2
        # nn.Embedding default init: weight ~ N(0, 1), shape [vocab, heads]
        self.pos_bias_weight = jax.random.normal(
            key, (self.vocab, heads), dtype=jnp.float32)

        # buffer: pos_indices [size^2, size^2]  (torch.meshgrid default 'ij')
        ar = jnp.arange(size)
        hh, ww = jnp.meshgrid(ar, ar, indexing="ij")
        pos = jnp.stack([hh, ww], axis=-1).reshape(size * size, 2)
        rel = pos[:, None, :] - pos[None, :, :] + (size - 1)
        self.pos_indices = (rel[..., 0] * (2 * size - 1) + rel[..., 1]).astype(jnp.int32)

        # Pad the (transposed) table with zero columns: column `vocab` is the
        # pad id (value 0 -> implements F.pad left-pad), remaining columns pad
        # vocab up to a multiple of 8 for a non-ragged MXU K tile.
        self.vocab_pad = _round_up(self.vocab + 1, 8)
        tab_t = self.pos_bias_weight.T                                   # [heads, vocab]
        self.table_pad = jnp.pad(
            tab_t, ((0, 0), (0, self.vocab_pad - self.vocab)))           # [heads, vocab_pad]

        # Cache of precomputed one-hot inputs, keyed by (i, j) (static buffer).
        self._onehot_cache = {}

    def _get_onehot(self, i, j):
        key = (i, j)
        cached = self._onehot_cache.get(key)
        if cached is not None:
            return cached

        ij = i * j
        tile_n = min(1024, _round_up(ij, 128))
        n_pad = _round_up(ij, tile_n)

        n = jnp.arange(n_pad)
        row = n // j
        col = n % j
        # pos_indices[row, col-1] for col >= 1 (clamped gather; masked below)
        gathered = self.pos_indices[jnp.clip(row, 0, i - 1),
                                    jnp.clip(col - 1, 0, j - 2)]
        pad_id = self.vocab  # zero column of table_pad
        idx_full = jnp.where((col == 0) | (n >= ij), pad_id, gathered)   # [n_pad]
        onehot = (jnp.arange(self.vocab_pad)[:, None]
                  == idx_full[None, :]).astype(jnp.float32)              # [vocab_pad, n_pad]

        self._onehot_cache[key] = (onehot, tile_n)
        return onehot, tile_n

    def __call__(self, qk):
        i, j = qk.shape[-2:]
        onehot, tile_n = self._get_onehot(i, j)
        out = relpos_bias_pallas(self.table_pad, onehot, tile_n)         # [heads, n_pad]
        return out[:, :i * j].reshape(self.heads, i, j)                  # free slice/reshape

    def reference(self, qk):
        # pure-JAX reference mirroring the PyTorch forward
        i, j = qk.shape[-2:]
        bias = self.pos_bias_weight[self.pos_indices[:i, :j - 1]]        # [i, j-1, heads]
        bias = jnp.transpose(bias, (2, 0, 1))                            # [heads, i, j-1]
        return jnp.pad(bias, ((0, 0), (0, 0), (1, 0)))                   # left-pad zero col


if __name__ == "__main__":
    key = jax.random.PRNGKey(0)
    k_w, k_qk = jax.random.split(key)

    size, heads = 4, 8
    mod = RelPosBias2d(size, heads, k_w)

    # qk as produced by the parent attention: [batch, heads, i, j], i = size^2, j = size^2 + 1
    i, j = size * size, size * size + 1
    qk = jax.random.normal(k_qk, (2, heads, i, j), dtype=jnp.float32)

    out = mod(qk)
    out = jax.block_until_ready(out)

    ref = mod.reference(qk)
    assert out.shape == (heads, i, j), out.shape
    assert out.dtype == jnp.float32
    assert jnp.allclose(out, ref, atol=1e-5), float(jnp.max(jnp.abs(out - ref)))
    print("KERNEL_OK")
</pallas_src>

<mosaic_0001>
module attributes {stable_mosaic.version = 11 : i64} {
  func.func @_relpos_bias_kernel(%arg0: i32, %arg1: memref<8x56xf32, #tpu.memory_space<vmem>>, %arg2: memref<56x384xf32, #tpu.memory_space<vmem>>, %arg3: memref<8x384xf32, #tpu.memory_space<vmem>>) attributes {dimension_semantics = [#tpu.dimension_semantics<parallel>], iteration_bounds = array<i64: 1>, scalar_prefetch = 0 : i64, scratch_operands = 0 : i64, tpu.core_type = #tpu.core_type<tc>, window_params = [{pipeline_mode = #tpu.pipeline_mode<synchronous>, transform_indices = @transform_0, window_bounds = array<i64: 8, 56>}, {transform_indices = @transform_1, window_bounds = array<i64: 56, 384>}, {transform_indices = @transform_2, window_bounds = array<i64: 8, 384>}]} {
    %c0 = arith.constant 0 : index
    %c0_0 = arith.constant 0 : index
    %0 = vector.load %arg1[%c0, %c0_0] : memref<8x56xf32, #tpu.memory_space<vmem>>, vector<8x56xf32>
    %c0_1 = arith.constant 0 : index
    %c0_2 = arith.constant 0 : index
    %1 = vector.load %arg2[%c0_1, %c0_2] : memref<56x384xf32, #tpu.memory_space<vmem>>, vector<56x384xf32>
    %cst = arith.constant dense<0.000000e+00> : vector<8x384xf32>
    %2 = tpu.matmul %0, %1, %cst {dimension_numbers = #tpu.dot_dimension_numbers<[1], [0], [0], [1], [0, 0, 1, 1], [], []>} : vector<8x56xf32>, vector<56x384xf32>, vector<8x384xf32> -> vector<8x384xf32>
    %c0_3 = arith.constant 0 : index
    %c0_4 = arith.constant 0 : index
    %3 = vector.load %arg3[%c0_3, %c0_4] : memref<8x384xf32, #tpu.memory_space<vmem>>, vector<8x384xf32>
    tpu.vector_store %arg3[%c0_3, %c0_4], %2 {strides = array<i32>} : memref<8x384xf32, #tpu.memory_space<vmem>>, vector<8x384xf32>,
    return
  }
  func.func @transform_0(%arg0: i32) -> (i32, i32) {
    %c0_i32 = arith.constant 0 : i32
    %c0_i32_0 = arith.constant 0 : i32
    %c0_i32_1 = arith.constant 0 : i32
    return %c0_i32, %c0_i32_0 : i32, i32
  }
  func.func @transform_1(%arg0: i32) -> (i32, i32) {
    %c0_i32 = arith.constant 0 : i32
    %c0_i32_0 = arith.constant 0 : i32
    return %c0_i32, %arg0 : i32, i32
  }
  func.func @transform_2(%arg0: i32) -> (i32, i32) {
    %c0_i32 = arith.constant 0 : i32
    %c0_i32_0 = arith.constant 0 : i32
    return %c0_i32, %arg0 : i32, i32
  }
}

</mosaic_0001>

<llo_original>
// kernel: tpu_custom_call.1
$region0: #{tpu_custom_call.1}
  #allocation0 [shape = 'u32[]', space=smem, size = 0x4, offset = 0x4, fixed_abs, tag = 'smem constant byte address 0x4 - core index']
  #allocation1 [shape = 'u32[144,128]{1,0:T(1,128)}', space=vmem, size = 0x12000, scoped, tag = 'internal scratch']
  %s0 = inlined_call_operand.hbm [shape: f32[8,56], index: 0, kind: input, shape index: {}]
  %s1 = inlined_call_operand.hbm [shape: f32[56,384], index: 1, kind: input, shape index: {}]
  %s2 = inlined_call_operand.hbm [shape: f32[8,384], index: 2, kind: output, shape index: {}]
  %s3 = sld [smem:[#allocation0]]
  $region26: #{tpu_custom_call.1} parent=0
    _
  %s5 = ssub.s32 1, %s3
  %s6 = scalar_select 0, %s5, %s3
  $region1: #{tpu_custom_call.1} parent=0
    #allocation2 [shape = 'u8[4096]{0}', space=vmem, size = 0x1000, scoped, tag = 'input window, operand 0, single buffered']
    #allocation3 [shape = 's32[1]{0}', space=sflag, size = 0x4, scoped, tag = 'scoped memory for tpu_custom_call.1']
    #allocation4 [shape = 's32[1]{0}', space=sflag, size = 0x4, scoped, tag = 'scoped memory for tpu_custom_call.1']
    #allocation5 [shape = 'u8[86016]{0}', space=vmem, size = 0x15000, scoped, tag = 'input window, operand 1, single buffered']
    #allocation6 [shape = 's32[1]{0}', space=sflag, size = 0x4, scoped, tag = 'scoped memory for tpu_custom_call.1']
    #allocation7 [shape = 'u8[12288]{0}', space=vmem, size = 0x3000, scoped, tag = 'output window, operand 0, single buffered']
    %7 = vsyncpa [#allocation3], 0
    %8 = vsyncpa [#allocation6], 0
    %9 = vsyncpa [#allocation4], 0
    // Predicated region
    $region2: #{tpu_custom_call.1} parent=1 // pred_check
      _
    $region3: #{tpu_custom_call.1} parent=1 // pred_check_branch
      %11 = sbr.rel (0) target = $region5
    $region4: #{tpu_custom_call.1} parent=1 // pred_region
      %s13 = ssub.s32 128, 128
      %14 = vsyncadd [#allocation3], %s13
      %s16 = sshll.u32 [#allocation2], 4
      %s17 = int_to_ptr.vmem [resolvable:$true] %s16
      %19 = dma.hbm_to_vmem [thread:$0]  %s0, 128, %s17, [#allocation3]
    $region5: #{tpu_custom_call.1} parent=1 // pred_fallthru
      _
    // Predicated region
    $region6: #{tpu_custom_call.1} parent=1 // pred_check
      _
    $region7: #{tpu_custom_call.1} parent=1 // pred_check_branch
      %21 = sbr.rel (0) target = $region9
    $region8: #{tpu_custom_call.1} parent=1 // pred_region
      %s23 = ssub.s32 2688, 2688
      %24 = vsyncadd [#allocation6], %s23
      %s25 = sshll.u32 [#allocation5], 4
      %s26 = int_to_ptr.vmem [resolvable:$true] %s25
      %31 = dma.hbm_to_vmem [thread:$0]  %s1, 2688, %s26, [#allocation6], 384, 384, 24
    $region9: #{tpu_custom_call.1} parent=1 // pred_fallthru
      _
    // Predicated region
    $region10: #{tpu_custom_call.1} parent=1 // pred_check
      _
    $region11: #{tpu_custom_call.1} parent=1 // pred_check_branch
      %33 = sbr.rel (0) target = $region13
    $region12: #{tpu_custom_call.1} parent=1 // pred_region
      %34 = dma.done [#allocation3], 128
    $region13: #{tpu_custom_call.1} parent=1 // pred_fallthru
      _
    // Predicated region
    $region14: #{tpu_custom_call.1} parent=1 // pred_check
      _
    $region15: #{tpu_custom_call.1} parent=1 // pred_check_branch
      %36 = sbr.rel (0) target = $region17
    $region16: #{tpu_custom_call.1} parent=1 // pred_region
      %37 = dma.done [#allocation6], 2688
    $region17: #{tpu_custom_call.1} parent=1 // pred_fallthru
      _
    %v38 = vld [vmem:[#allocation2] sm:$0xff]
    %v39 = vld [vmem:[#allocation5] sm:$0xff]
    %v40 = vld [vmem:[#allocation5 + $0x8] sm:$0xff]
    %v41 = vld [vmem:[#allocation5 + $0x10] sm:$0xff]
    %v42 = vld [vmem:[#allocation5 + $0x18] sm:$0xff]
    %v43 = vld [vmem:[#allocation5 + $0x20] sm:$0xff]
    %v44 = vld [vmem:[#allocation5 + $0x28] sm:$0xff]
    %v45 = vld [vmem:[#allocation5 + $0x30] sm:$0xff]
    %v46 = vld [vmem:[#allocation5 + $0x38] sm:$0xff]
    %v47 = vld [vmem:[#allocation5 + $0x40] sm:$0xff]
    %v48 = vld [vmem:[#allocation5 + $0x48] sm:$0xff]
    %v49 = vld [vmem:[#allocation5 + $0x50] sm:$0xff]
    %v50 = vld [vmem:[#allocation5 + $0x58] sm:$0xff]
    %v51 = vld [vmem:[#allocation5 + $0x60] sm:$0xff]
    %v52 = vld [vmem:[#allocation5 + $0x68] sm:$0xff]
    %v53 = vld [vmem:[#allocation5 + $0x70] sm:$0xff]
    %v54 = vld [vmem:[#allocation5 + $0x78] sm:$0xff]
    %v55 = vld [vmem:[#allocation5 + $0x80] sm:$0xff]
    %v56 = vld [vmem:[#allocation5 + $0x88] sm:$0xff]
    %v57 = vld [vmem:[#allocation5 + $0x90] sm:$0xff]
    %v58 = vld [vmem:[#allocation5 + $0x98] sm:$0xff]
    %v59 = vld [vmem:[#allocation5 + $0xa0] sm:$0xff]
    %vm60 = vcmask 457728
    %v62 = vsel %vm60, %v38, 0
    %64 = vmatprep.subr.mxu0 %v40
    %65 = vmatpush1.msra.mxu0 %v39
    %66 = vmatprep.subr.mxu0 %v43
    %67 = vmatpush1.msra.mxu0 %v42
    %68 = vmatprep.subr.mxu0 %v46
    %69 = vmatpush1.msra.mxu0 %v45
    %70 = vmatprep.subr.mxu0 %v49
    %71 = vmatpush1.msra.mxu0 %v48
    %72 = vmatprep.subr.mxu0 %v52
    %73 = vmatpush1.msra.mxu0 %v51
    %74 = vmatprep.subr.mxu0 %v55
    %75 = vmatpush1.msra.mxu0 %v54
    %76 = vmatprep.subr.mxu0 %v58
    %77 = vmatpush1.msra.mxu0 %v57
    %78 = vmatprep.subr.mxu0 0.0
    %79 = vmatpush1.msra.mxu0 0.0
    %80 = vmatprep.subr.mxu0 0.0
    %81 = vmatpush1.msra.mxu0 0.0
    %82 = vmatprep.subr.mxu0 0.0
    %83 = vmatpush1.msra.mxu0 0.0
    %84 = vmatprep.subr.mxu0 0.0
    %85 = vmatpush1.msra.mxu0 0.0
    %86 = vmatprep.subr.mxu0 0.0
    %87 = vmatpush1.msra.mxu0 0.0
    %88 = vmatprep.subr.mxu0 0.0
    %89 = vmatpush1.msra.mxu0 0.0
    %90 = vmatprep.subr.mxu0 0.0
    %91 = vmatpush1.msra.mxu0 0.0
    %92 = vmatprep.subr.mxu0 0.0
    %93 = vmatpush1.msra.mxu0 0.0
    %94 = vmatprep.subr.mxu0 0.0
    %95 = vmatpush1.msra.mxu0 0.0
    %96 = vmatprep.subr.mxu0 0.0
    %97 = vmatpush1.msra.mxu0 0.0
    %98 = vmatprep.subr.mxu0 0.0
    %99 = vmatpush1.msra.mxu0 0.0
    %100 = vmatprep.subr.mxu0 0.0
    %101 = vmatpush1.msra.mxu0 0.0
    %102 = vmatprep.subr.mxu0 0.0
    %103 = vmatpush1.msra.mxu0 0.0
    %104 = vmatprep.subr.mxu0 0.0
    %105 = vmatpush1.msra.mxu0 0.0
    %106 = vmatprep.subr.mxu0 0.0
    %107 = vmatpush1.msra.mxu0 0.0
    %108 = vmatprep.subr.mxu0 0.0
    %109 = vmatpush1.msra.mxu0 0.0
    %110 = vmatprep.subr.mxu0 0.0
    %111 = vmatpush1.msra.mxu0 0.0
    %112 = vmatprep.subr.mxu0 0.0
    %113 = vmatpush1.msra.mxu0 0.0
    %114 = vmatprep.subr.mxu0 0.0
    %115 = vmatpush1.msra.mxu0 0.0
    %116 = vmatprep.subr.mxu0 0.0
    %117 = vmatpush1.msra.mxu0 0.0
    %118 = vmatprep.subr.mxu0 0.0
    %119 = vmatpush1.msra.mxu0 0.0
    %120 = vmatprep.subr.mxu0 0.0
    %121 = vmatpush1.msra.mxu0 0.0
    %122 = vmatprep.subr.mxu0 0.0
    %123 = vmatpush1.msra.mxu0 0.0
    %124 = vmatprep.subr.mxu0 0.0
    %125 = vmatpush1.msra.mxu0 0.0
    %126 = vmatprep.subr.mxu0 0.0
    %127 = vmatpush1.msra.mxu0 0.0
    %128 = vmatprep.mubr.f32.mxu0 0.0
    %129 = vmatmul.mubr.f32.gmra.mrb[0].mxu0 %v62
    %v130 = vpop.f32.mrb[0].mxu0
    %v131 = vadd.f32 0.0, %v130
    %v132 = vpop.f32.mrb[0].mxu0
    %v133 = vadd.f32 0.0, %v132
    %134 = vdwg.mxu0
    %135 = vmatprep.subr.mxu0 0.0
    %136 = vmatpush1.msra.mxu0 %v41
    %137 = vmatprep.subr.mxu0 0.0
    %138 = vmatpush1.msra.mxu0 %v44
    %139 = vmatprep.subr.mxu0 0.0
    %140 = vmatpush1.msra.mxu0 %v47
    %141 = vmatprep.subr.mxu0 0.0
    %142 = vmatpush1.msra.mxu0 %v50
    %143 = vmatprep.subr.mxu0 0.0
    %144 = vmatpush1.msra.mxu0 %v53
    %145 = vmatprep.subr.mxu0 0.0
    %146 = vmatpush1.msra.mxu0 %v56
    %147 = vmatprep.subr.mxu0 0.0
    %148 = vmatpush1.msra.mxu0 %v59
    %149 = vmatprep.subr.mxu0 0.0
    %150 = vmatpush1.msra.mxu0 0.0
    %151 = vmatprep.subr.mxu0 0.0
    %152 = vmatpush1.msra.mxu0 0.0
    %153 = vmatprep.subr.mxu0 0.0
    %154 = vmatpush1.msra.mxu0 0.0
    %155 = vmatprep.subr.mxu0 0.0
    %156 = vmatpush1.msra.mxu0 0.0
    %157 = vmatprep.subr.mxu0 0.0
    %158 = vmatpush1.msra.mxu0 0.0
    %159 = vmatprep.subr.mxu0 0.0
    %160 = vmatpush1.msra.mxu0 0.0
    %161 = vmatprep.subr.mxu0 0.0
    %162 = vmatpush1.msra.mxu0 0.0
    %163 = vmatprep.subr.mxu0 0.0
    %164 = vmatpush1.msra.mxu0 0.0
    %165 = vmatprep.subr.mxu0 0.0
    %166 = vmatpush1.msra.mxu0 0.0
    %167 = vmatprep.subr.mxu0 0.0
    %168 = vmatpush1.msra.mxu0 0.0
    %169 = vmatprep.subr.mxu0 0.0
    %170 = vmatpush1.msra.mxu0 0.0
    %171 = vmatprep.subr.mxu0 0.0
    %172 = vmatpush1.msra.mxu0 0.0
    %173 = vmatprep.subr.mxu0 0.0
    %174 = vmatpush1.msra.mxu0 0.0
    %175 = vmatprep.subr.mxu0 0.0
    %176 = vmatpush1.msra.mxu0 0.0
    %177 = vmatprep.subr.mxu0 0.0
    %178 = vmatpush1.msra.mxu0 0.0
    %179 = vmatprep.subr.mxu0 0.0
    %180 = vmatpush1.msra.mxu0 0.0
    %181 = vmatprep.subr.mxu0 0.0
    %182 = vmatpush1.msra.mxu0 0.0
    %183 = vmatprep.subr.mxu0 0.0
    %184 = vmatpush1.msra.mxu0 0.0
    %185 = vmatprep.subr.mxu0 0.0
    %186 = vmatpush1.msra.mxu0 0.0
    %187 = vmatprep.subr.mxu0 0.0
    %188 = vmatpush1.msra.mxu0 0.0
    %189 = vmatprep.subr.mxu0 0.0
    %190 = vmatpush1.msra.mxu0 0.0
    %191 = vmatprep.subr.mxu0 0.0
    %192 = vmatpush1.msra.mxu0 0.0
    %193 = vmatprep.subr.mxu0 0.0
    %194 = vmatpush1.msra.mxu0 0.0
    %195 = vmatprep.subr.mxu0 0.0
    %196 = vmatpush1.msra.mxu0 0.0
    %197 = vmatprep.subr.mxu0 0.0
    %198 = vmatpush1.msra.mxu0 0.0
    %199 = vmatprep.mubr.f32.mxu0 0.0
    %200 = vmatmul.mubr.f32.gmra.mrb[0].mxu0 %v62
    %v201 = vpop.f32.mrb[0].mxu0
    %v202 = vadd.f32 0.0, %v201
    %v203 = vpop.f32.mrb[0].mxu0
    %204 = vdwg.mxu0
    %205 = vst [vmem:[#allocation7] sm:$0xff] %v131
    %206 = vst [vmem:[#allocation7 + $0x8] sm:$0xff] %v133
    %207 = vst [vmem:[#allocation7 + $0x10] sm:$0xff] %v202
    // Predicated region
    $region18: #{tpu_custom_call.1} parent=1 // pred_check
      _
    $region19: #{tpu_custom_call.1} parent=1 // pred_check_branch
      %209 = sbr.rel (0) target = $region21
    $region20: #{tpu_custom_call.1} parent=1 // pred_region
      %s211 = ssub.s32 384, 384
      %212 = vsyncadd [#allocation4], %s211
      %s214 = sshll.u32 [#allocation7], 4
      %s215 = int_to_ptr.vmem [resolvable:$true] %s214
      %217 = dma.vmem_to_hbm [thread:$0]  %s215, 384, %s2, [#allocation4]
    $region21: #{tpu_custom_call.1} parent=1 // pred_fallthru
      _
    // Predicated region
    $region22: #{tpu_custom_call.1} parent=1 // pred_check
      _
    $region23: #{tpu_custom_call.1} parent=1 // pred_check_branch
      %219 = sbr.rel (0) target = $region25
    $region24: #{tpu_custom_call.1} parent=1 // pred_region
      %220 = dma.done [#allocation4], 384
    $region25: #{tpu_custom_call.1} parent=1 // pred_fallthru
      _
    %221 = vsyncpa [#allocation3], 1
    %222 = vsyncpa [#allocation6], 1
    %223 = vsyncpa [#allocation4], 1

</llo_original>
